<compile_context>
chip_gen: v6e
topology: v6e:2x2x1
jax: 0.10.0
libtpu: 0.0.40
codegen_flags: <defaults>
</compile_context>

<pallas_src>
import jax
import jax.numpy as jnp
from jax.experimental import pallas as pl
from jax.experimental.pallas import tpu as pltpu


def _round_up(v, m):
    return (v + m - 1) // m * m


def memory_module_kernel(x_ref, w_ref, b_ref, mem_ref, o_ref):
    # x_ref:   (TN, Hp)  tile of input rows
    # w_ref:   (Hp, Mp)  attention weight (transposed, zero-padded)
    # b_ref:   (1,  Mp)  attention bias (padded slots = -1e30)
    # mem_ref: (Mp, Hp)  memory bank (zero-padded)
    # o_ref:   (TN, Hp)  output tile
    logits = jnp.dot(x_ref[...], w_ref[...],
                     preferred_element_type=jnp.float32)
    logits = logits + b_ref[...]                        # broadcast (1, Mp) over rows

    # Numerically-stable softmax over the memory axis (last dim).
    m = jnp.max(logits, axis=-1, keepdims=True)
    p = jnp.exp(logits - m)
    denom = jnp.sum(p, axis=-1, keepdims=True)
    attn = p * pl.reciprocal(denom, approx=True)        # EUP vrcp (free slot)

    out = jnp.dot(attn.astype(mem_ref.dtype), mem_ref[...],
                  preferred_element_type=jnp.float32)
    o_ref[...] = out.astype(o_ref.dtype)


def _vmem_estimate_bytes(tn, Hp, Mp, in_item, out_item):
    return (2 * tn * Hp * in_item        # x tile, double-buffered
            + 2 * tn * Hp * out_item     # out tile, double-buffered
            + Hp * Mp * in_item          # W, single-buffered (grid-invariant)
            + Mp * Hp * in_item          # memory, single-buffered (grid-invariant)
            + 8 * Mp * 4                 # bias (sublane-padded f32)
            + 3 * tn * Mp * 4)           # f32 logits / exp / attn intermediates


def memory_module_forward(x, w_attn, b_attn, memory, *,
                          tile_rows=512, compute_dtype=None):
    """x: (B, S, H); w_attn: (M, H) torch Linear.weight; b_attn: (M,); memory: (M, H)."""
    B, S, H = x.shape
    M, H2 = memory.shape
    assert H2 == H
    N = B * S

    out_dtype = x.dtype
    cdt = jnp.dtype(compute_dtype) if compute_dtype is not None else jnp.dtype(x.dtype)
    in_item = cdt.itemsize
    out_item = jnp.dtype(out_dtype).itemsize

    # Lane-dense padding of the contraction / output dims (multiples of 128).
    Hp = _round_up(H, 128)
    Mp = _round_up(M, 128)

    # Row tile: multiple of the sublane packing (8 for f32, 16 for bf16),
    # no bigger than the (padded) row count, and shrunk until the working set
    # fits a budget that is safe on every TPU generation (incl. v7x 64 MiB).
    sub = 16 if in_item == 2 else 8
    tn = max(sub, min(_round_up(tile_rows, sub), _round_up(N, sub)))
    vmem_budget = 40 << 20
    while tn > sub and _vmem_estimate_bytes(tn, Hp, Mp, in_item, out_item) > vmem_budget:
        tn = max(sub, _round_up(tn // 2, sub))
    Np = _round_up(N, tn)

    vmem_limit = int(min(
        64 << 20,
        max(32 << 20,
            1.5 * _vmem_estimate_bytes(tn, Hp, Mp, in_item, out_item) + (4 << 20))))

    # Pad operands. Padded memory slots get a very negative bias so softmax
    # assigns them exactly zero weight; padded H columns are zero everywhere,
    # so padded outputs are zero and padded rows are simply dropped below.
    x2d = jnp.pad(x.reshape(N, H).astype(cdt), ((0, Np - N), (0, Hp - H)))
    w_t = jnp.pad(w_attn.T.astype(cdt), ((0, Hp - H), (0, Mp - M)))
    mem_p = jnp.pad(memory.astype(cdt), ((0, Mp - M), (0, Hp - H)))
    b2d = jnp.pad(b_attn.astype(jnp.float32).reshape(1, M),
                  ((0, 0), (0, Mp - M)), constant_values=-1e30)

    def build_call(invariant_mode):
        in_specs = [
            pl.BlockSpec((tn, Hp), lambda i: (i, 0)),                  # x rows tile
            pl.BlockSpec((Hp, Mp), lambda i: (0, 0),
                         pipeline_mode=invariant_mode),                # attn weight
            pl.BlockSpec((1, Mp), lambda i: (0, 0),
                         pipeline_mode=invariant_mode),                # attn bias
            pl.BlockSpec((Mp, Hp), lambda i: (0, 0),
                         pipeline_mode=invariant_mode),                # memory bank
        ]
        return pl.pallas_call(
            memory_module_kernel,
            out_shape=jax.ShapeDtypeStruct((Np, Hp), out_dtype),
            grid_spec=pltpu.PrefetchScalarGridSpec(
                num_scalar_prefetch=0,
                grid=(Np // tn,),
                in_specs=in_specs,
                out_specs=pl.BlockSpec((tn, Hp), lambda i: (i, 0)),
            ),
            compiler_params=pltpu.CompilerParams(
                dimension_semantics=("parallel",),   # shards rows across v7x's 2 TCs
                vmem_limit_bytes=vmem_limit),
        )

    # TODO(synk): for memory_size >~ 8-16K, add a second ("arbitrary") grid axis
    # over M with an online-softmax accumulator instead of full (tn, Mp) logits.
    try:
        # Grid-invariant operands never change across the grid -> single-buffer.
        out2d = build_call(pl.Buffered(1))(x2d, w_t, b2d, mem_p)
    except Exception:
        # Some JAX versions restrict pipeline_mode buffer counts; the default
        # double-buffered path is semantically identical (just uses more VMEM).
        out2d = build_call(None)(x2d, w_t, b2d, mem_p)

    return out2d[:N, :H].reshape(B, S, H)


def memory_module_reference(x, w_attn, b_attn, memory):
    logits = jnp.einsum("bsh,mh->bsm", x, w_attn) + b_attn
    attn = jax.nn.softmax(logits, axis=-1)
    return jnp.einsum("bsm,mh->bsh", attn, memory)


if __name__ == "__main__":
    B, S, H, M = 2, 8, 32, 16   # batch, seq, hidden_dim, memory_size

    key = jax.random.PRNGKey(0)
    kx, kmem, kw, kb = jax.random.split(key, 4)

    # Deterministic synthetic parameters (shapes from MemoryModule.__init__)
    x = jax.random.normal(kx, (B, S, H), dtype=jnp.float32)
    memory = jax.random.normal(kmem, (M, H), dtype=jnp.float32)        # nn.Parameter
    w_attn = jax.random.normal(kw, (M, H), dtype=jnp.float32) * 0.1    # Linear.weight
    b_attn = jax.random.normal(kb, (M,), dtype=jnp.float32) * 0.1      # Linear.bias

    # Production note: pass compute_dtype=jnp.bfloat16 on v6e/v7x for full MXU
    # rate and half the HBM traffic on the grid-invariant W / memory banks.
    out = memory_module_forward(x, w_attn, b_attn, memory)
    out = jax.block_until_ready(out)

    ref = memory_module_reference(x, w_attn, b_attn, memory)
    assert out.shape == (B, S, H)
    # Tolerance relaxed from 1e-5 -> 2e-3 because the softmax denominator now
    # uses the EUP approximate reciprocal (pl.reciprocal(..., approx=True)).
    assert jnp.allclose(out, ref, atol=2e-3, rtol=2e-3), "mismatch vs reference"

    print("KERNEL_OK")
</pallas_src>

<mosaic_0001>
module attributes {stable_mosaic.version = 11 : i64} {
  func.func @memory_module_kernel(%arg0: i32, %arg1: memref<16x128xf32, #tpu.memory_space<vmem>>, %arg2: memref<128x128xf32, #tpu.memory_space<vmem>>, %arg3: memref<1x128xf32, #tpu.memory_space<vmem>>, %arg4: memref<128x128xf32, #tpu.memory_space<vmem>>, %arg5: memref<16x128xf32, #tpu.memory_space<vmem>>) attributes {dimension_semantics = [#tpu.dimension_semantics<parallel>], iteration_bounds = array<i64: 1>, scalar_prefetch = 0 : i64, scratch_operands = 0 : i64, tpu.core_type = #tpu.core_type<tc>, window_params = [{transform_indices = @transform_0, window_bounds = array<i64: 16, 128>}, {pipeline_mode = #tpu.pipeline_mode<synchronous>, transform_indices = @transform_1, window_bounds = array<i64: 128, 128>}, {pipeline_mode = #tpu.pipeline_mode<synchronous>, transform_indices = @transform_2, window_bounds = array<i64: 1, 128>}, {pipeline_mode = #tpu.pipeline_mode<synchronous>, transform_indices = @transform_3, window_bounds = array<i64: 128, 128>}, {transform_indices = @transform_4, window_bounds = array<i64: 16, 128>}]} {
    %c0 = arith.constant 0 : index
    %c0_0 = arith.constant 0 : index
    %0 = vector.load %arg1[%c0, %c0_0] : memref<16x128xf32, #tpu.memory_space<vmem>>, vector<16x128xf32>
    %c0_1 = arith.constant 0 : index
    %c0_2 = arith.constant 0 : index
    %1 = vector.load %arg2[%c0_1, %c0_2] : memref<128x128xf32, #tpu.memory_space<vmem>>, vector<128x128xf32>
    %cst = arith.constant dense<0.000000e+00> : vector<16x128xf32>
    %2 = tpu.matmul %0, %1, %cst {dimension_numbers = #tpu.dot_dimension_numbers<[1], [0], [0], [1], [0, 0, 1, 1], [], []>} : vector<16x128xf32>, vector<128x128xf32>, vector<16x128xf32> -> vector<16x128xf32>
    %c0_3 = arith.constant 0 : index
    %c0_4 = arith.constant 0 : index
    %3 = vector.load %arg3[%c0_3, %c0_4] : memref<1x128xf32, #tpu.memory_space<vmem>>, vector<1x128xf32>
    %4 = vector.broadcast %3 : vector<1x128xf32> to vector<16x128xf32>
    %5 = arith.addf %2, %4 : vector<16x128xf32>
    %cst_5 = arith.constant dense<0xFF800000> : vector<16xf32>
    %6 = vector.multi_reduction <maximumf>, %5, %cst_5 [1] : vector<16x128xf32> to vector<16xf32>
    %7 = vector.shape_cast %6 : vector<16xf32> to vector<16x1xf32>
    %8 = vector.broadcast %7 : vector<16x1xf32> to vector<16x128xf32>
    %9 = arith.subf %5, %8 : vector<16x128xf32>
    %10 = math.exp %9 : vector<16x128xf32>
    %cst_6 = arith.constant dense<0.000000e+00> : vector<16xf32>
    %11 = vector.multi_reduction <add>, %10, %cst_6 [1] : vector<16x128xf32> to vector<16xf32>
    %12 = vector.shape_cast %11 : vector<16xf32> to vector<16x1xf32>
    %13 = tpu.reciprocal %12 {approx = true} : vector<16x1xf32> -> vector<16x1xf32>
    %14 = vector.broadcast %13 : vector<16x1xf32> to vector<16x128xf32>
    %15 = arith.mulf %10, %14 : vector<16x128xf32>
    %c0_7 = arith.constant 0 : index
    %c0_8 = arith.constant 0 : index
    %16 = vector.load %arg4[%c0_7, %c0_8] : memref<128x128xf32, #tpu.memory_space<vmem>>, vector<128x128xf32>
    %cst_9 = arith.constant dense<0.000000e+00> : vector<16x128xf32>
    %17 = tpu.matmul %15, %16, %cst_9 {dimension_numbers = #tpu.dot_dimension_numbers<[1], [0], [0], [1], [0, 0, 1, 1], [], []>} : vector<16x128xf32>, vector<128x128xf32>, vector<16x128xf32> -> vector<16x128xf32>
    %c0_10 = arith.constant 0 : index
    %c0_11 = arith.constant 0 : index
    %18 = vector.load %arg5[%c0_10, %c0_11] : memref<16x128xf32, #tpu.memory_space<vmem>>, vector<16x128xf32>
    tpu.vector_store %arg5[%c0_10, %c0_11], %17 {strides = array<i32>} : memref<16x128xf32, #tpu.memory_space<vmem>>, vector<16x128xf32>,
    return
  }
  func.func @transform_0(%arg0: i32) -> (i32, i32) {
    %c0_i32 = arith.constant 0 : i32
    %c0_i32_0 = arith.constant 0 : i32
    return %arg0, %c0_i32 : i32, i32
  }
  func.func @transform_1(%arg0: i32) -> (i32, i32) {
    %c0_i32 = arith.constant 0 : i32
    %c0_i32_0 = arith.constant 0 : i32
    %c0_i32_1 = arith.constant 0 : i32
    return %c0_i32, %c0_i32_0 : i32, i32
  }
  func.func @transform_2(%arg0: i32) -> (i32, i32) {
    %c0_i32 = arith.constant 0 : i32
    %c0_i32_0 = arith.constant 0 : i32
    %c0_i32_1 = arith.constant 0 : i32
    return %c0_i32, %c0_i32_0 : i32, i32
  }
  func.func @transform_3(%arg0: i32) -> (i32, i32) {
    %c0_i32 = arith.constant 0 : i32
    %c0_i32_0 = arith.constant 0 : i32
    %c0_i32_1 = arith.constant 0 : i32
    return %c0_i32, %c0_i32_0 : i32, i32
  }
  func.func @transform_4(%arg0: i32) -> (i32, i32) {
    %c0_i32 = arith.constant 0 : i32
    %c0_i32_0 = arith.constant 0 : i32
    return %arg0, %c0_i32 : i32, i32
  }
}

module attributes {stable_mosaic.version = 11 : i64} {
  func.func @memory_module_kernel(%arg0: i32, %arg1: memref<16x128xf32, #tpu.memory_space<vmem>>, %arg2: memref<128x128xf32, #tpu.memory_space<vmem>>, %arg3: memref<1x128xf32, #tpu.memory_space<vmem>>, %arg4: memref<128x128xf32, #tpu.memory_space<vmem>>, %arg5: memref<16x128xf32, #tpu.memory_space<vmem>>) attributes {dimension_semantics = [#tpu.dimension_semantics<parallel>], iteration_bounds = array<i64: 1>, scalar_prefetch = 0 : i64, scratch_operands = 0 : i64, tpu.core_type = #tpu.core_type<tc>, window_params = [{transform_indices = @transform_0, window_bounds = array<i64: 16, 128>}, {pipeline_mode = #tpu.pipeline_mode<synchronous>, transform_indices = @transform_1, window_bounds = array<i64: 128, 128>}, {pipeline_mode = #tpu.pipeline_mode<synchronous>, transform_indices = @transform_2, window_bounds = array<i64: 1, 128>}, {pipeline_mode = #tpu.pipeline_mode<synchronous>, transform_indices = @transform_3, window_bounds = array<i64: 128, 128>}, {transform_indices = @transform_4, window_bounds = array<i64: 16, 128>}]} {
    %c0 = arith.constant 0 : index
    %c0_0 = arith.constant 0 : index
    %0 = vector.load %arg1[%c0, %c0_0] : memref<16x128xf32, #tpu.memory_space<vmem>>, vector<16x128xf32>
    %c0_1 = arith.constant 0 : index
    %c0_2 = arith.constant 0 : index
    %1 = vector.load %arg2[%c0_1, %c0_2] : memref<128x128xf32, #tpu.memory_space<vmem>>, vector<128x128xf32>
    %cst = arith.constant dense<0.000000e+00> : vector<16x128xf32>
    %2 = tpu.matmul %0, %1, %cst {dimension_numbers = #tpu.dot_dimension_numbers<[1], [0], [0], [1], [0, 0, 1, 1], [], []>} : vector<16x128xf32>, vector<128x128xf32>, vector<16x128xf32> -> vector<16x128xf32>
    %c0_3 = arith.constant 0 : index
    %c0_4 = arith.constant 0 : index
    %3 = vector.load %arg3[%c0_3, %c0_4] : memref<1x128xf32, #tpu.memory_space<vmem>>, vector<1x128xf32>
    %4 = vector.broadcast %3 : vector<1x128xf32> to vector<16x128xf32>
    %5 = arith.addf %2, %4 : vector<16x128xf32>
    %cst_5 = arith.constant dense<0xFF800000> : vector<16xf32>
    %6 = vector.multi_reduction <maximumf>, %5, %cst_5 [1] : vector<16x128xf32> to vector<16xf32>
    %7 = vector.shape_cast %6 : vector<16xf32> to vector<16x1xf32>
    %8 = vector.broadcast %7 : vector<16x1xf32> to vector<16x128xf32>
    %9 = arith.subf %5, %8 : vector<16x128xf32>
    %10 = math.exp %9 : vector<16x128xf32>
    %cst_6 = arith.constant dense<0.000000e+00> : vector<16xf32>
    %11 = vector.multi_reduction <add>, %10, %cst_6 [1] : vector<16x128xf32> to vector<16xf32>
    %12 = vector.shape_cast %11 : vector<16xf32> to vector<16x1xf32>
    %13 = tpu.reciprocal %12 {approx = true} : vector<16x1xf32> -> vector<16x1xf32>
    %14 = vector.broadcast %13 : vector<16x1xf32> to vector<16x128xf32>
    %15 = arith.mulf %10, %14 : vector<16x128xf32>
    %c0_7 = arith.constant 0 : index
    %c0_8 = arith.constant 0 : index
    %16 = vector.load %arg4[%c0_7, %c0_8] : memref<128x128xf32, #tpu.memory_space<vmem>>, vector<128x128xf32>
    %cst_9 = arith.constant dense<0.000000e+00> : vector<16x128xf32>
    %17 = tpu.matmul %15, %16, %cst_9 {dimension_numbers = #tpu.dot_dimension_numbers<[1], [0], [0], [1], [0, 0, 1, 1], [], []>} : vector<16x128xf32>, vector<128x128xf32>, vector<16x128xf32> -> vector<16x128xf32>
    %c0_10 = arith.constant 0 : index
    %c0_11 = arith.constant 0 : index
    %18 = vector.load %arg5[%c0_10, %c0_11] : memref<16x128xf32, #tpu.memory_space<vmem>>, vector<16x128xf32>
    tpu.vector_store %arg5[%c0_10, %c0_11], %17 {strides = array<i32>} : memref<16x128xf32, #tpu.memory_space<vmem>>, vector<16x128xf32>,
    return
  }
  func.func @transform_0(%arg0: i32) -> (i32, i32) {
    %c0_i32 = arith.constant 0 : i32
    %c0_i32_0 = arith.constant 0 : i32
    return %arg0, %c0_i32 : i32, i32
  }
  func.func @transform_1(%arg0: i32) -> (i32, i32) {
    %c0_i32 = arith.constant 0 : i32
    %c0_i32_0 = arith.constant 0 : i32
    %c0_i32_1 = arith.constant 0 : i32
    return %c0_i32, %c0_i32_0 : i32, i32
  }
  func.func @transform_2(%arg0: i32) -> (i32, i32) {
    %c0_i32 = arith.constant 0 : i32
    %c0_i32_0 = arith.constant 0 : i32
    %c0_i32_1 = arith.constant 0 : i32
    return %c0_i32, %c0_i32_0 : i32, i32
  }
  func.func @transform_3(%arg0: i32) -> (i32, i32) {
    %c0_i32 = arith.constant 0 : i32
    %c0_i32_0 = arith.constant 0 : i32
    %c0_i32_1 = arith.constant 0 : i32
    return %c0_i32, %c0_i32_0 : i32, i32
  }
  func.func @transform_4(%arg0: i32) -> (i32, i32) {
    %c0_i32 = arith.constant 0 : i32
    %c0_i32_0 = arith.constant 0 : i32
    return %arg0, %c0_i32 : i32, i32
  }
}

</mosaic_0001>

<llo_original>
// kernel: tpu_custom_call.1
$region0: #{tpu_custom_call.1}
  #allocation0 [shape = 'u32[]', space=smem, size = 0x4, offset = 0x4, fixed_abs, tag = 'smem constant byte address 0x4 - core index']
  #allocation1 [shape = 'u32[144,128]{1,0:T(1,128)}', space=vmem, size = 0x12000, scoped, tag = 'internal scratch']
  %s0 = inlined_call_operand.hbm [shape: f32[16,128], index: 0, kind: input, shape index: {}]
  %s1 = inlined_call_operand.hbm [shape: f32[128,128], index: 1, kind: input, shape index: {}]
  %s2 = inlined_call_operand.vmem [shape: f32[1,128], index: 2, kind: input, shape index: {}]
  %s3 = inlined_call_operand.hbm [shape: f32[128,128], index: 3, kind: input, shape index: {}]
  %s4 = inlined_call_operand.hbm [shape: f32[16,128], index: 4, kind: output, shape index: {}]
  %s5 = sld [smem:[#allocation0]]
  $region38: #{tpu_custom_call.1} parent=0
    _
  %s7 = ssub.s32 1, %s5
  %s8 = scalar_select 0, %s7, %s5
  $region1: #{tpu_custom_call.1} parent=0
    #allocation2 [shape = 'u8[8192]{0}', space=vmem, size = 0x2000, scoped, tag = 'input window, operand 0, single buffered']
    #allocation3 [shape = 's32[1]{0}', space=sflag, size = 0x4, scoped, tag = 'scoped memory for tpu_custom_call.1']
    #allocation4 [shape = 's32[1]{0}', space=sflag, size = 0x4, scoped, tag = 'scoped memory for tpu_custom_call.1']
    #allocation5 [shape = 'u8[65536]{0}', space=vmem, size = 0x10000, scoped, tag = 'input window, operand 1, single buffered']
    #allocation6 [shape = 's32[1]{0}', space=sflag, size = 0x4, scoped, tag = 'scoped memory for tpu_custom_call.1']
    #allocation7 [shape = 'u8[65536]{0}', space=vmem, size = 0x10000, scoped, tag = 'input window, operand 3, single buffered']
    #allocation8 [shape = 'u8[8192]{0}', space=vmem, size = 0x2000, scoped, tag = 'output window, operand 0, single buffered']
    %9 = vsyncpa [#allocation3], 0
    %10 = vsyncpa [#allocation6], 0
    %11 = vsyncpa [#allocation4], 0
    // Predicated region
    $region2: #{tpu_custom_call.1} parent=1 // pred_check
      _
    $region3: #{tpu_custom_call.1} parent=1 // pred_check_branch
      %13 = sbr.rel (0) target = $region5
    $region4: #{tpu_custom_call.1} parent=1 // pred_region
      %s15 = ssub.s32 256, 256
      %16 = vsyncadd [#allocation3], %s15
      %s17 = sshll.u32 [#allocation2], 4
      %s18 = int_to_ptr.vmem [resolvable:$true] %s17
      %23 = dma.hbm_to_vmem [thread:$0]  %s0, 256, %s18, [#allocation3], 128, 128, 8
    $region5: #{tpu_custom_call.1} parent=1 // pred_fallthru
      _
    // Predicated region
    $region6: #{tpu_custom_call.1} parent=1 // pred_check
      _
    $region7: #{tpu_custom_call.1} parent=1 // pred_check_branch
      %25 = sbr.rel (0) target = $region9
    $region8: #{tpu_custom_call.1} parent=1 // pred_region
      %s27 = ssub.s32 2048, 2048
      %28 = vsyncadd [#allocation6], %s27
      %s29 = sshll.u32 [#allocation5], 4
      %s30 = int_to_ptr.vmem [resolvable:$true] %s29
      %35 = dma.hbm_to_vmem [thread:$0]  %s1, 2048, %s30, [#allocation6], 128, 128, 8
    $region9: #{tpu_custom_call.1} parent=1 // pred_fallthru
      _
    // Predicated region
    $region10: #{tpu_custom_call.1} parent=1 // pred_check
      _
    $region11: #{tpu_custom_call.1} parent=1 // pred_check_branch
      %37 = sbr.rel (0) target = $region13
    $region12: #{tpu_custom_call.1} parent=1 // pred_region
      _
    $region13: #{tpu_custom_call.1} parent=1 // pred_fallthru
      _
    // Predicated region
    $region14: #{tpu_custom_call.1} parent=1 // pred_check
      _
    $region15: #{tpu_custom_call.1} parent=1 // pred_check_branch
      %39 = sbr.rel (0) target = $region17
    $region16: #{tpu_custom_call.1} parent=1 // pred_region
      %s41 = ssub.s32 2048, 2048
      %42 = vsyncadd [#allocation6], %s41
      %s43 = sshll.u32 [#allocation7], 4
      %s44 = int_to_ptr.vmem [resolvable:$true] %s43
      %49 = dma.hbm_to_vmem [thread:$0]  %s3, 2048, %s44, [#allocation6], 128, 128, 8
    $region17: #{tpu_custom_call.1} parent=1 // pred_fallthru
      _
    // Predicated region
    $region18: #{tpu_custom_call.1} parent=1 // pred_check
      _
    $region19: #{tpu_custom_call.1} parent=1 // pred_check_branch
      %51 = sbr.rel (0) target = $region21
    $region20: #{tpu_custom_call.1} parent=1 // pred_region
      %52 = dma.done [#allocation3], 256
    $region21: #{tpu_custom_call.1} parent=1 // pred_fallthru
      _
    // Predicated region
    $region22: #{tpu_custom_call.1} parent=1 // pred_check
      _
    $region23: #{tpu_custom_call.1} parent=1 // pred_check_branch
      %54 = sbr.rel (0) target = $region25
    $region24: #{tpu_custom_call.1} parent=1 // pred_region
      %55 = dma.done [#allocation6], 2048
    $region25: #{tpu_custom_call.1} parent=1 // pred_fallthru
      _
    // Predicated region
    $region26: #{tpu_custom_call.1} parent=1 // pred_check
      _
    $region27: #{tpu_custom_call.1} parent=1 // pred_check_branch
      %57 = sbr.rel (0) target = $region29
    $region28: #{tpu_custom_call.1} parent=1 // pred_region
      %58 = dma.done [#allocation6], 2048
    $region29: #{tpu_custom_call.1} parent=1 // pred_fallthru
      _
    %v59 = vld [vmem:[#allocation2] sm:$0xff]
    %v60 = vld [vmem:[#allocation2 + $0x8] sm:$0xff]
    %v61 = vld [vmem:[#allocation5] sm:$0xff]
    %v62 = vld [vmem:[#allocation5 + $0x8] sm:$0xff]
    %v63 = vld [vmem:[#allocation5 + $0x10] sm:$0xff]
    %v64 = vld [vmem:[#allocation5 + $0x18] sm:$0xff]
    %v65 = vld [vmem:[#allocation5 + $0x20] sm:$0xff]
    %v66 = vld [vmem:[#allocation5 + $0x28] sm:$0xff]
    %v67 = vld [vmem:[#allocation5 + $0x30] sm:$0xff]
    %v68 = vld [vmem:[#allocation5 + $0x38] sm:$0xff]
    %v69 = vld [vmem:[#allocation5 + $0x40] sm:$0xff]
    %v70 = vld [vmem:[#allocation5 + $0x48] sm:$0xff]
    %v71 = vld [vmem:[#allocation5 + $0x50] sm:$0xff]
    %v72 = vld [vmem:[#allocation5 + $0x58] sm:$0xff]
    %v73 = vld [vmem:[#allocation5 + $0x60] sm:$0xff]
    %v74 = vld [vmem:[#allocation5 + $0x68] sm:$0xff]
    %v75 = vld [vmem:[#allocation5 + $0x70] sm:$0xff]
    %v76 = vld [vmem:[#allocation5 + $0x78] sm:$0xff]
    %v77 = vld [vmem:[%s2] sm:$0x1]
    %v79 = vlaneseq
    %v80 = vshrl.u32 %v79, 7
    %v81 = vsub.s32 0, %v80
    %v82 = vrot.slane %v77, %v81
    %84 = vmatprep.subr.mxu0 0.0
    %85 = vmatpush1.msra.mxu0 %v76
    %86 = vmatprep.subr.mxu0 0.0
    %87 = vmatpush1.msra.mxu0 %v75
    %88 = vmatprep.subr.mxu0 0.0
    %89 = vmatpush1.msra.mxu0 %v74
    %90 = vmatprep.subr.mxu0 0.0
    %91 = vmatpush1.msra.mxu0 %v73
    %92 = vmatprep.subr.mxu0 0.0
    %93 = vmatpush1.msra.mxu0 %v72
    %94 = vmatprep.subr.mxu0 0.0
    %95 = vmatpush1.msra.mxu0 %v71
    %96 = vmatprep.subr.mxu0 0.0
    %97 = vmatpush1.msra.mxu0 %v70
    %98 = vmatprep.subr.mxu0 0.0
    %99 = vmatpush1.msra.mxu0 %v69
    %100 = vmatprep.subr.mxu0 0.0
    %101 = vmatpush1.msra.mxu0 %v68
    %102 = vmatprep.subr.mxu0 0.0
    %103 = vmatpush1.msra.mxu0 %v67
    %104 = vmatprep.subr.mxu0 0.0
    %105 = vmatpush1.msra.mxu0 %v66
    %106 = vmatprep.subr.mxu0 0.0
    %107 = vmatpush1.msra.mxu0 %v65
    %108 = vmatprep.subr.mxu0 0.0
    %109 = vmatpush1.msra.mxu0 %v64
    %110 = vmatprep.subr.mxu0 0.0
    %111 = vmatpush1.msra.mxu0 %v63
    %112 = vmatprep.subr.mxu0 0.0
    %113 = vmatpush1.msra.mxu0 %v62
    %114 = vmatprep.subr.mxu0 0.0
    %115 = vmatpush1.msra.mxu0 %v61
    %116 = vmatprep.subr.mxu0 0.0
    %117 = vmatpush2.msra.mxu0 0.0
    %118 = vmatprep.subr.mxu0 0.0
    %119 = vmatpush2.msra.mxu0 0.0
    %120 = vmatprep.subr.mxu0 0.0
    %121 = vmatpush2.msra.mxu0 0.0
    %122 = vmatprep.subr.mxu0 0.0
    %123 = vmatpush2.msra.mxu0 0.0
    %124 = vmatprep.subr.mxu0 0.0
    %125 = vmatpush2.msra.mxu0 0.0
    %126 = vmatprep.subr.mxu0 0.0
    %127 = vmatpush2.msra.mxu0 0.0
    %128 = vmatprep.subr.mxu0 0.0
    %129 = vmatpush2.msra.mxu0 0.0
    %130 = vmatprep.subr.mxu0 0.0
    %131 = vmatpush2.msra.mxu0 0.0
    %132 = vmatprep.subr.mxu0 0.0
    %133 = vmatpush2.msra.mxu0 0.0
    %134 = vmatprep.subr.mxu0 0.0
    %135 = vmatpush2.msra.mxu0 0.0
    %136 = vmatprep.subr.mxu0 0.0
    %137 = vmatpush2.msra.mxu0 0.0
    %138 = vmatprep.subr.mxu0 0.0
    %139 = vmatpush2.msra.mxu0 0.0
    %140 = vmatprep.subr.mxu0 0.0
    %141 = vmatpush2.msra.mxu0 0.0
    %142 = vmatprep.subr.mxu0 0.0
    %143 = vmatpush2.msra.mxu0 0.0
    %144 = vmatprep.subr.mxu0 0.0
    %145 = vmatpush2.msra.mxu0 0.0
    %146 = vmatprep.subr.mxu0 0.0
    %147 = vmatpush2.msra.mxu0 0.0
    %148 = vmatprep.mubr.f32.mxu0 0.0
    %149 = vmatmul.mubr.f32.gmra.mxu0 %v59
    %v150 = vpop.f32.mrf.mxu0
    %v151 = vadd.f32 %v82, %v150
    %v152 = vpop.f32.mrf.mxu0
    %153 = vmatprep.mubr.f32.mxu0 0.0
    %154 = vmatmul.mubr.f32.gmra.mxu0 %v60
    %v155 = vpop.f32.mrf.mxu0
    %v156 = vadd.f32 %v82, %v155
    %v157 = vpop.f32.mrf.mxu0
    %158 = vdwg.mxu0
    %159 = vmax.xlane.f32.xlu0 %v151
    %v160 = vpop.xlane.xlu0 %159
    %161 = vmax.xlane.f32.xlu0 %v156
    %v162 = vpop.xlane.xlu0 %161
    %v163 = vsub.f32 %v151, %v160
    %v164 = vsub.f32 %v156, %v162
    %v165 = vmul.f32 %v163, 1.442695
    %v166 = vpow.pop %v165
    %v167 = vmul.f32 %v164, 1.442695
    %v168 = vpow.pop %v167
    %169 = vadd.xlane.f32.xlu0 %v166
    %v170 = vpop.xlane.xlu0 %169
    %171 = vadd.xlane.f32.xlu0 %v168
    %v172 = vpop.xlane.xlu0 %171
    %v173 = vrcp.pop %v170
    %v174 = vrcp.pop %v172
    %v175 = vmul.f32 %v166, %v173
    %v176 = vmul.f32 %v168, %v174
    %v177 = vld [vmem:[#allocation7] sm:$0xff]
    %v178 = vld [vmem:[#allocation7 + $0x8] sm:$0xff]
    %v179 = vld [vmem:[#allocation7 + $0x10] sm:$0xff]
    %v180 = vld [vmem:[#allocation7 + $0x18] sm:$0xff]
    %v181 = vld [vmem:[#allocation7 + $0x20] sm:$0xff]
    %v182 = vld [vmem:[#allocation7 + $0x28] sm:$0xff]
    %v183 = vld [vmem:[#allocation7 + $0x30] sm:$0xff]
    %v184 = vld [vmem:[#allocation7 + $0x38] sm:$0xff]
    %v185 = vld [vmem:[#allocation7 + $0x40] sm:$0xff]
    %v186 = vld [vmem:[#allocation7 + $0x48] sm:$0xff]
    %v187 = vld [vmem:[#allocation7 + $0x50] sm:$0xff]
    %v188 = vld [vmem:[#allocation7 + $0x58] sm:$0xff]
    %v189 = vld [vmem:[#allocation7 + $0x60] sm:$0xff]
    %v190 = vld [vmem:[#allocation7 + $0x68] sm:$0xff]
    %v191 = vld [vmem:[#allocation7 + $0x70] sm:$0xff]
    %v192 = vld [vmem:[#allocation7 + $0x78] sm:$0xff]
    %193 = vmatprep.subr.mxu0 0.0
    %194 = vmatpush1.msra.mxu0 %v192
    %195 = vmatprep.subr.mxu0 0.0
    %196 = vmatpush1.msra.mxu0 %v191
    %197 = vmatprep.subr.mxu0 0.0
    %198 = vmatpush1.msra.mxu0 %v190
    %199 = vmatprep.subr.mxu0 0.0
    %200 = vmatpush1.msra.mxu0 %v189
    %201 = vmatprep.subr.mxu0 0.0
    %202 = vmatpush1.msra.mxu0 %v188
    %203 = vmatprep.subr.mxu0 0.0
    %204 = vmatpush1.msra.mxu0 %v187
    %205 = vmatprep.subr.mxu0 0.0
    %206 = vmatpush1.msra.mxu0 %v186
    %207 = vmatprep.subr.mxu0 0.0
    %208 = vmatpush1.msra.mxu0 %v185
    %209 = vmatprep.subr.mxu0 0.0
    %210 = vmatpush1.msra.mxu0 %v184
    %211 = vmatprep.subr.mxu0 0.0
    %212 = vmatpush1.msra.mxu0 %v183
    %213 = vmatprep.subr.mxu0 0.0
    %214 = vmatpush1.msra.mxu0 %v182
    %215 = vmatprep.subr.mxu0 0.0
    %216 = vmatpush1.msra.mxu0 %v181
    %217 = vmatprep.subr.mxu0 0.0
    %218 = vmatpush1.msra.mxu0 %v180
    %219 = vmatprep.subr.mxu0 0.0
    %220 = vmatpush1.msra.mxu0 %v179
    %221 = vmatprep.subr.mxu0 0.0
    %222 = vmatpush1.msra.mxu0 %v178
    %223 = vmatprep.subr.mxu0 0.0
    %224 = vmatpush1.msra.mxu0 %v177
    %225 = vmatprep.subr.mxu0 0.0
    %226 = vmatpush2.msra.mxu0 0.0
    %227 = vmatprep.subr.mxu0 0.0
    %228 = vmatpush2.msra.mxu0 0.0
    %229 = vmatprep.subr.mxu0 0.0
    %230 = vmatpush2.msra.mxu0 0.0
    %231 = vmatprep.subr.mxu0 0.0
    %232 = vmatpush2.msra.mxu0 0.0
    %233 = vmatprep.subr.mxu0 0.0
    %234 = vmatpush2.msra.mxu0 0.0
    %235 = vmatprep.subr.mxu0 0.0
    %236 = vmatpush2.msra.mxu0 0.0
    %237 = vmatprep.subr.mxu0 0.0
    %238 = vmatpush2.msra.mxu0 0.0
    %239 = vmatprep.subr.mxu0 0.0
    %240 = vmatpush2.msra.mxu0 0.0
    %241 = vmatprep.subr.mxu0 0.0
    %242 = vmatpush2.msra.mxu0 0.0
    %243 = vmatprep.subr.mxu0 0.0
    %244 = vmatpush2.msra.mxu0 0.0
    %245 = vmatprep.subr.mxu0 0.0
    %246 = vmatpush2.msra.mxu0 0.0
    %247 = vmatprep.subr.mxu0 0.0
    %248 = vmatpush2.msra.mxu0 0.0
    %249 = vmatprep.subr.mxu0 0.0
    %250 = vmatpush2.msra.mxu0 0.0
    %251 = vmatprep.subr.mxu0 0.0
    %252 = vmatpush2.msra.mxu0 0.0
    %253 = vmatprep.subr.mxu0 0.0
    %254 = vmatpush2.msra.mxu0 0.0
    %255 = vmatprep.subr.mxu0 0.0
    %256 = vmatpush2.msra.mxu0 0.0
    %257 = vmatprep.mubr.f32.mxu0 0.0
    %258 = vmatmul.mubr.f32.gmra.mxu0 %v175
    %v259 = vpop.f32.mrf.mxu0
    %v260 = vadd.f32 0.0, %v259
    %v261 = vpop.f32.mrf.mxu0
    %262 = vmatprep.mubr.f32.mxu0 0.0
    %263 = vmatmul.mubr.f32.gmra.mxu0 %v176
    %v264 = vpop.f32.mrf.mxu0
    %v265 = vadd.f32 0.0, %v264
    %v266 = vpop.f32.mrf.mxu0
    %267 = vdwg.mxu0
    %268 = vst [vmem:[#allocation8] sm:$0xff] %v260
    %269 = vst [vmem:[#allocation8 + $0x8] sm:$0xff] %v265
    // Predicated region
    $region30: #{tpu_custom_call.1} parent=1 // pred_check
      _
    $region31: #{tpu_custom_call.1} parent=1 // pred_check_branch
      %271 = sbr.rel (0) target = $region33
    $region32: #{tpu_custom_call.1} parent=1 // pred_region
      %s273 = ssub.s32 256, 256
      %274 = vsyncadd [#allocation4], %s273
      %s275 = sshll.u32 [#allocation8], 4
      %s276 = int_to_ptr.vmem [resolvable:$true] %s275
      %281 = dma.vmem_to_hbm [thread:$0]  %s276, 256, %s4, [#allocation4], 128, 128, 8
    $region33: #{tpu_custom_call.1} parent=1 // pred_fallthru
      _
    // Predicated region
    $region34: #{tpu_custom_call.1} parent=1 // pred_check
      _
    $region35: #{tpu_custom_call.1} parent=1 // pred_check_branch
      %283 = sbr.rel (0) target = $region37
    $region36: #{tpu_custom_call.1} parent=1 // pred_region
      %284 = dma.done [#allocation4], 256
    $region37: #{tpu_custom_call.1} parent=1 // pred_fallthru
      _
    %285 = vsyncpa [#allocation3], 1
    %286 = vsyncpa [#allocation6], 1
    %287 = vsyncpa [#allocation4], 1

// kernel: tpu_custom_call.1
$region0: #{tpu_custom_call.1}
  #allocation0 [shape = 'u32[]', space=smem, size = 0x4, offset = 0x4, fixed_abs, tag = 'smem constant byte address 0x4 - core index']
  #allocation1 [shape = 'u32[144,128]{1,0:T(1,128)}', space=vmem, size = 0x12000, scoped, tag = 'internal scratch']
  %s0 = inlined_call_operand.hbm [shape: f32[16,128], index: 0, kind: input, shape index: {}]
  %s1 = inlined_call_operand.hbm [shape: f32[128,128], index: 1, kind: input, shape index: {}]
  %s2 = inlined_call_operand.vmem [shape: f32[1,128], index: 2, kind: input, shape index: {}]
  %s3 = inlined_call_operand.hbm [shape: f32[128,128], index: 3, kind: input, shape index: {}]
  %s4 = inlined_call_operand.hbm [shape: f32[16,128], index: 4, kind: output, shape index: {}]
  %s5 = sld [smem:[#allocation0]]
  $region38: #{tpu_custom_call.1} parent=0
    _
  %s7 = ssub.s32 1, %s5
  %s8 = scalar_select 0, %s7, %s5
  $region1: #{tpu_custom_call.1} parent=0
    #allocation2 [shape = 'u8[8192]{0}', space=vmem, size = 0x2000, scoped, tag = 'input window, operand 0, single buffered']
    #allocation3 [shape = 's32[1]{0}', space=sflag, size = 0x4, scoped, tag = 'scoped memory for tpu_custom_call.1']
    #allocation4 [shape = 's32[1]{0}', space=sflag, size = 0x4, scoped, tag = 'scoped memory for tpu_custom_call.1']
    #allocation5 [shape = 'u8[65536]{0}', space=vmem, size = 0x10000, scoped, tag = 'input window, operand 1, single buffered']
    #allocation6 [shape = 's32[1]{0}', space=sflag, size = 0x4, scoped, tag = 'scoped memory for tpu_custom_call.1']
    #allocation7 [shape = 'u8[65536]{0}', space=vmem, size = 0x10000, scoped, tag = 'input window, operand 3, single buffered']
    #allocation8 [shape = 'u8[8192]{0}', space=vmem, size = 0x2000, scoped, tag = 'output window, operand 0, single buffered']
    %9 = vsyncpa [#allocation3], 0
    %10 = vsyncpa [#allocation6], 0
    %11 = vsyncpa [#allocation4], 0
    // Predicated region
    $region2: #{tpu_custom_call.1} parent=1 // pred_check
      _
    $region3: #{tpu_custom_call.1} parent=1 // pred_check_branch
      %13 = sbr.rel (0) target = $region5
    $region4: #{tpu_custom_call.1} parent=1 // pred_region
      %s15 = ssub.s32 256, 256
      %16 = vsyncadd [#allocation3], %s15
      %s17 = sshll.u32 [#allocation2], 4
      %s18 = int_to_ptr.vmem [resolvable:$true] %s17
      %23 = dma.hbm_to_vmem [thread:$0]  %s0, 256, %s18, [#allocation3], 128, 128, 8
    $region5: #{tpu_custom_call.1} parent=1 // pred_fallthru
      _
    // Predicated region
    $region6: #{tpu_custom_call.1} parent=1 // pred_check
      _
    $region7: #{tpu_custom_call.1} parent=1 // pred_check_branch
      %25 = sbr.rel (0) target = $region9
    $region8: #{tpu_custom_call.1} parent=1 // pred_region
      %s27 = ssub.s32 2048, 2048
      %28 = vsyncadd [#allocation6], %s27
      %s29 = sshll.u32 [#allocation5], 4
      %s30 = int_to_ptr.vmem [resolvable:$true] %s29
      %35 = dma.hbm_to_vmem [thread:$0]  %s1, 2048, %s30, [#allocation6], 128, 128, 8
    $region9: #{tpu_custom_call.1} parent=1 // pred_fallthru
      _
    // Predicated region
    $region10: #{tpu_custom_call.1} parent=1 // pred_check
      _
    $region11: #{tpu_custom_call.1} parent=1 // pred_check_branch
      %37 = sbr.rel (0) target = $region13
    $region12: #{tpu_custom_call.1} parent=1 // pred_region
      _
    $region13: #{tpu_custom_call.1} parent=1 // pred_fallthru
      _
    // Predicated region
    $region14: #{tpu_custom_call.1} parent=1 // pred_check
      _
    $region15: #{tpu_custom_call.1} parent=1 // pred_check_branch
      %39 = sbr.rel (0) target = $region17
    $region16: #{tpu_custom_call.1} parent=1 // pred_region
      %s41 = ssub.s32 2048, 2048
      %42 = vsyncadd [#allocation6], %s41
      %s43 = sshll.u32 [#allocation7], 4
      %s44 = int_to_ptr.vmem [resolvable:$true] %s43
      %49 = dma.hbm_to_vmem [thread:$0]  %s3, 2048, %s44, [#allocation6], 128, 128, 8
    $region17: #{tpu_custom_call.1} parent=1 // pred_fallthru
      _
    // Predicated region
    $region18: #{tpu_custom_call.1} parent=1 // pred_check
      _
    $region19: #{tpu_custom_call.1} parent=1 // pred_check_branch
      %51 = sbr.rel (0) target = $region21
    $region20: #{tpu_custom_call.1} parent=1 // pred_region
      %52 = dma.done [#allocation3], 256
    $region21: #{tpu_custom_call.1} parent=1 // pred_fallthru
      _
    // Predicated region
    $region22: #{tpu_custom_call.1} parent=1 // pred_check
      _
    $region23: #{tpu_custom_call.1} parent=1 // pred_check_branch
      %54 = sbr.rel (0) target = $region25
    $region24: #{tpu_custom_call.1} parent=1 // pred_region
      %55 = dma.done [#allocation6], 2048
    $region25: #{tpu_custom_call.1} parent=1 // pred_fallthru
      _
    // Predicated region
    $region26: #{tpu_custom_call.1} parent=1 // pred_check
      _
    $region27: #{tpu_custom_call.1} parent=1 // pred_check_branch
      %57 = sbr.rel (0) target = $region29
    $region28: #{tpu_custom_call.1} parent=1 // pred_region
      %58 = dma.done [#allocation6], 2048
    $region29: #{tpu_custom_call.1} parent=1 // pred_fallthru
      _
    %v59 = vld [vmem:[#allocation2] sm:$0xff]
    %v60 = vld [vmem:[#allocation2 + $0x8] sm:$0xff]
    %v61 = vld [vmem:[#allocation5] sm:$0xff]
    %v62 = vld [vmem:[#allocation5 + $0x8] sm:$0xff]
    %v63 = vld [vmem:[#allocation5 + $0x10] sm:$0xff]
    %v64 = vld [vmem:[#allocation5 + $0x18] sm:$0xff]
    %v65 = vld [vmem:[#allocation5 + $0x20] sm:$0xff]
    %v66 = vld [vmem:[#allocation5 + $0x28] sm:$0xff]
    %v67 = vld [vmem:[#allocation5 + $0x30] sm:$0xff]
    %v68 = vld [vmem:[#allocation5 + $0x38] sm:$0xff]
    %v69 = vld [vmem:[#allocation5 + $0x40] sm:$0xff]
    %v70 = vld [vmem:[#allocation5 + $0x48] sm:$0xff]
    %v71 = vld [vmem:[#allocation5 + $0x50] sm:$0xff]
    %v72 = vld [vmem:[#allocation5 + $0x58] sm:$0xff]
    %v73 = vld [vmem:[#allocation5 + $0x60] sm:$0xff]
    %v74 = vld [vmem:[#allocation5 + $0x68] sm:$0xff]
    %v75 = vld [vmem:[#allocation5 + $0x70] sm:$0xff]
    %v76 = vld [vmem:[#allocation5 + $0x78] sm:$0xff]
    %v77 = vld [vmem:[%s2] sm:$0x1]
    %v79 = vlaneseq
    %v80 = vshrl.u32 %v79, 7
    %v81 = vsub.s32 0, %v80
    %v82 = vrot.slane %v77, %v81
    %84 = vmatprep.subr.mxu0 0.0
    %85 = vmatpush1.msra.mxu0 %v76
    %86 = vmatprep.subr.mxu0 0.0
    %87 = vmatpush1.msra.mxu0 %v75
    %88 = vmatprep.subr.mxu0 0.0
    %89 = vmatpush1.msra.mxu0 %v74
    %90 = vmatprep.subr.mxu0 0.0
    %91 = vmatpush1.msra.mxu0 %v73
    %92 = vmatprep.subr.mxu0 0.0
    %93 = vmatpush1.msra.mxu0 %v72
    %94 = vmatprep.subr.mxu0 0.0
    %95 = vmatpush1.msra.mxu0 %v71
    %96 = vmatprep.subr.mxu0 0.0
    %97 = vmatpush1.msra.mxu0 %v70
    %98 = vmatprep.subr.mxu0 0.0
    %99 = vmatpush1.msra.mxu0 %v69
    %100 = vmatprep.subr.mxu0 0.0
    %101 = vmatpush1.msra.mxu0 %v68
    %102 = vmatprep.subr.mxu0 0.0
    %103 = vmatpush1.msra.mxu0 %v67
    %104 = vmatprep.subr.mxu0 0.0
    %105 = vmatpush1.msra.mxu0 %v66
    %106 = vmatprep.subr.mxu0 0.0
    %107 = vmatpush1.msra.mxu0 %v65
    %108 = vmatprep.subr.mxu0 0.0
    %109 = vmatpush1.msra.mxu0 %v64
    %110 = vmatprep.subr.mxu0 0.0
    %111 = vmatpush1.msra.mxu0 %v63
    %112 = vmatprep.subr.mxu0 0.0
    %113 = vmatpush1.msra.mxu0 %v62
    %114 = vmatprep.subr.mxu0 0.0
    %115 = vmatpush1.msra.mxu0 %v61
    %116 = vmatprep.subr.mxu0 0.0
    %117 = vmatpush2.msra.mxu0 0.0
    %118 = vmatprep.subr.mxu0 0.0
    %119 = vmatpush2.msra.mxu0 0.0
    %120 = vmatprep.subr.mxu0 0.0
    %121 = vmatpush2.msra.mxu0 0.0
    %122 = vmatprep.subr.mxu0 0.0
    %123 = vmatpush2.msra.mxu0 0.0
    %124 = vmatprep.subr.mxu0 0.0
    %125 = vmatpush2.msra.mxu0 0.0
    %126 = vmatprep.subr.mxu0 0.0
    %127 = vmatpush2.msra.mxu0 0.0
    %128 = vmatprep.subr.mxu0 0.0
    %129 = vmatpush2.msra.mxu0 0.0
    %130 = vmatprep.subr.mxu0 0.0
    %131 = vmatpush2.msra.mxu0 0.0
    %132 = vmatprep.subr.mxu0 0.0
    %133 = vmatpush2.msra.mxu0 0.0
    %134 = vmatprep.subr.mxu0 0.0
    %135 = vmatpush2.msra.mxu0 0.0
    %136 = vmatprep.subr.mxu0 0.0
    %137 = vmatpush2.msra.mxu0 0.0
    %138 = vmatprep.subr.mxu0 0.0
    %139 = vmatpush2.msra.mxu0 0.0
    %140 = vmatprep.subr.mxu0 0.0
    %141 = vmatpush2.msra.mxu0 0.0
    %142 = vmatprep.subr.mxu0 0.0
    %143 = vmatpush2.msra.mxu0 0.0
    %144 = vmatprep.subr.mxu0 0.0
    %145 = vmatpush2.msra.mxu0 0.0
    %146 = vmatprep.subr.mxu0 0.0
    %147 = vmatpush2.msra.mxu0 0.0
    %148 = vmatprep.mubr.f32.mxu0 0.0
    %149 = vmatmul.mubr.f32.gmra.mxu0 %v59
    %v150 = vpop.f32.mrf.mxu0
    %v151 = vadd.f32 %v82, %v150
    %v152 = vpop.f32.mrf.mxu0
    %153 = vmatprep.mubr.f32.mxu0 0.0
    %154 = vmatmul.mubr.f32.gmra.mxu0 %v60
    %v155 = vpop.f32.mrf.mxu0
    %v156 = vadd.f32 %v82, %v155
    %v157 = vpop.f32.mrf.mxu0
    %158 = vdwg.mxu0
    %159 = vmax.xlane.f32.xlu0 %v151
    %v160 = vpop.xlane.xlu0 %159
    %161 = vmax.xlane.f32.xlu0 %v156
    %v162 = vpop.xlane.xlu0 %161
    %v163 = vsub.f32 %v151, %v160
    %v164 = vsub.f32 %v156, %v162
    %v165 = vmul.f32 %v163, 1.442695
    %v166 = vpow.pop %v165
    %v167 = vmul.f32 %v164, 1.442695
    %v168 = vpow.pop %v167
    %169 = vadd.xlane.f32.xlu0 %v166
    %v170 = vpop.xlane.xlu0 %169
    %171 = vadd.xlane.f32.xlu0 %v168
    %v172 = vpop.xlane.xlu0 %171
    %v173 = vrcp.pop %v170
    %v174 = vrcp.pop %v172
    %v175 = vmul.f32 %v166, %v173
    %v176 = vmul.f32 %v168, %v174
    %v177 = vld [vmem:[#allocation7] sm:$0xff]
    %v178 = vld [vmem:[#allocation7 + $0x8] sm:$0xff]
    %v179 = vld [vmem:[#allocation7 + $0x10] sm:$0xff]
    %v180 = vld [vmem:[#allocation7 + $0x18] sm:$0xff]
    %v181 = vld [vmem:[#allocation7 + $0x20] sm:$0xff]
    %v182 = vld [vmem:[#allocation7 + $0x28] sm:$0xff]
    %v183 = vld [vmem:[#allocation7 + $0x30] sm:$0xff]
    %v184 = vld [vmem:[#allocation7 + $0x38] sm:$0xff]
    %v185 = vld [vmem:[#allocation7 + $0x40] sm:$0xff]
    %v186 = vld [vmem:[#allocation7 + $0x48] sm:$0xff]
    %v187 = vld [vmem:[#allocation7 + $0x50] sm:$0xff]
    %v188 = vld [vmem:[#allocation7 + $0x58] sm:$0xff]
    %v189 = vld [vmem:[#allocation7 + $0x60] sm:$0xff]
    %v190 = vld [vmem:[#allocation7 + $0x68] sm:$0xff]
    %v191 = vld [vmem:[#allocation7 + $0x70] sm:$0xff]
    %v192 = vld [vmem:[#allocation7 + $0x78] sm:$0xff]
    %193 = vmatprep.subr.mxu0 0.0
    %194 = vmatpush1.msra.mxu0 %v192
    %195 = vmatprep.subr.mxu0 0.0
    %196 = vmatpush1.msra.mxu0 %v191
    %197 = vmatprep.subr.mxu0 0.0
    %198 = vmatpush1.msra.mxu0 %v190
    %199 = vmatprep.subr.mxu0 0.0
    %200 = vmatpush1.msra.mxu0 %v189
    %201 = vmatprep.subr.mxu0 0.0
    %202 = vmatpush1.msra.mxu0 %v188
    %203 = vmatprep.subr.mxu0 0.0
    %204 = vmatpush1.msra.mxu0 %v187
    %205 = vmatprep.subr.mxu0 0.0
    %206 = vmatpush1.msra.mxu0 %v186
    %207 = vmatprep.subr.mxu0 0.0
    %208 = vmatpush1.msra.mxu0 %v185
    %209 = vmatprep.subr.mxu0 0.0
    %210 = vmatpush1.msra.mxu0 %v184
    %211 = vmatprep.subr.mxu0 0.0
    %212 = vmatpush1.msra.mxu0 %v183
    %213 = vmatprep.subr.mxu0 0.0
    %214 = vmatpush1.msra.mxu0 %v182
    %215 = vmatprep.subr.mxu0 0.0
    %216 = vmatpush1.msra.mxu0 %v181
    %217 = vmatprep.subr.mxu0 0.0
    %218 = vmatpush1.msra.mxu0 %v180
    %219 = vmatprep.subr.mxu0 0.0
    %220 = vmatpush1.msra.mxu0 %v179
    %221 = vmatprep.subr.mxu0 0.0
    %222 = vmatpush1.msra.mxu0 %v178
    %223 = vmatprep.subr.mxu0 0.0
    %224 = vmatpush1.msra.mxu0 %v177
    %225 = vmatprep.subr.mxu0 0.0
    %226 = vmatpush2.msra.mxu0 0.0
    %227 = vmatprep.subr.mxu0 0.0
    %228 = vmatpush2.msra.mxu0 0.0
    %229 = vmatprep.subr.mxu0 0.0
    %230 = vmatpush2.msra.mxu0 0.0
    %231 = vmatprep.subr.mxu0 0.0
    %232 = vmatpush2.msra.mxu0 0.0
    %233 = vmatprep.subr.mxu0 0.0
    %234 = vmatpush2.msra.mxu0 0.0
    %235 = vmatprep.subr.mxu0 0.0
    %236 = vmatpush2.msra.mxu0 0.0
    %237 = vmatprep.subr.mxu0 0.0
    %238 = vmatpush2.msra.mxu0 0.0
    %239 = vmatprep.subr.mxu0 0.0
    %240 = vmatpush2.msra.mxu0 0.0
    %241 = vmatprep.subr.mxu0 0.0
    %242 = vmatpush2.msra.mxu0 0.0
    %243 = vmatprep.subr.mxu0 0.0
    %244 = vmatpush2.msra.mxu0 0.0
    %245 = vmatprep.subr.mxu0 0.0
    %246 = vmatpush2.msra.mxu0 0.0
    %247 = vmatprep.subr.mxu0 0.0
    %248 = vmatpush2.msra.mxu0 0.0
    %249 = vmatprep.subr.mxu0 0.0
    %250 = vmatpush2.msra.mxu0 0.0
    %251 = vmatprep.subr.mxu0 0.0
    %252 = vmatpush2.msra.mxu0 0.0
    %253 = vmatprep.subr.mxu0 0.0
    %254 = vmatpush2.msra.mxu0 0.0
    %255 = vmatprep.subr.mxu0 0.0
    %256 = vmatpush2.msra.mxu0 0.0
    %257 = vmatprep.mubr.f32.mxu0 0.0
    %258 = vmatmul.mubr.f32.gmra.mxu0 %v175
    %v259 = vpop.f32.mrf.mxu0
    %v260 = vadd.f32 0.0, %v259
    %v261 = vpop.f32.mrf.mxu0
    %262 = vmatprep.mubr.f32.mxu0 0.0
    %263 = vmatmul.mubr.f32.gmra.mxu0 %v176
    %v264 = vpop.f32.mrf.mxu0
    %v265 = vadd.f32 0.0, %v264
    %v266 = vpop.f32.mrf.mxu0
    %267 = vdwg.mxu0
    %268 = vst [vmem:[#allocation8] sm:$0xff] %v260
    %269 = vst [vmem:[#allocation8 + $0x8] sm:$0xff] %v265
    // Predicated region
    $region30: #{tpu_custom_call.1} parent=1 // pred_check
      _
    $region31: #{tpu_custom_call.1} parent=1 // pred_check_branch
      %271 = sbr.rel (0) target = $region33
    $region32: #{tpu_custom_call.1} parent=1 // pred_region
      %s273 = ssub.s32 256, 256
      %274 = vsyncadd [#allocation4], %s273
      %s275 = sshll.u32 [#allocation8], 4
      %s276 = int_to_ptr.vmem [resolvable:$true] %s275
      %281 = dma.vmem_to_hbm [thread:$0]  %s276, 256, %s4, [#allocation4], 128, 128, 8
    $region33: #{tpu_custom_call.1} parent=1 // pred_fallthru
      _
    // Predicated region
    $region34: #{tpu_custom_call.1} parent=1 // pred_check
      _
    $region35: #{tpu_custom_call.1} parent=1 // pred_check_branch
      %283 = sbr.rel (0) target = $region37
    $region36: #{tpu_custom_call.1} parent=1 // pred_region
      %284 = dma.done [#allocation4], 256
    $region37: #{tpu_custom_call.1} parent=1 // pred_fallthru
      _
    %285 = vsyncpa [#allocation3], 1
    %286 = vsyncpa [#allocation6], 1
    %287 = vsyncpa [#allocation4], 1

</llo_original>
